<compile_context>
chip_gen: v6e
topology: v6e:2x2x1
jax: 0.10.0
libtpu: 0.0.40
codegen_flags: <defaults>
</compile_context>

<pallas_src>
import math

import jax
import jax.numpy as jnp
import numpy as np
from jax.experimental import pallas as pl
from jax.experimental.pallas import tpu as pltpu

# ----------------------------- problem sizes --------------------------------
N_NODES = 8          # number of graph nodes
N_EDGES = 16         # number of edges
IN_CH = 32           # in_channels
NUM_FILTERS = 32     # num_filters
OUT_CH = 32          # out_channels
NUM_GAUSS = 16       # edge_attr feature dim (RBF expansion size)
CUTOFF = 5.0

SUBLANE = 8          # f32 sublane count


def _round_up(v, m):
    return ((v + m - 1) // m) * m


def _pk_offsets(in_ch, g, f):
    """Row offsets of each weight block inside the packed parameter buffer."""
    off_wm1 = _round_up(in_ch, SUBLANE)
    off_wm2 = off_wm1 + _round_up(g, SUBLANE)
    off_w2 = off_wm2 + _round_up(f, SUBLANE)
    off_b = off_w2 + _round_up(f, SUBLANE)
    rows = off_b + SUBLANE
    return off_wm1, off_wm2, off_w2, off_b, rows


# --------------------- one-time parameter packing (hoisted) ------------------
def pack_params(params):
    """Pack every weight + bias into ONE contiguous f32 buffer (single input DMA).

    Called once at init and cached/reused across forward calls -- the per-call
    wrapper never rebuilds it.
    """
    f32 = jnp.float32
    in_ch, f = params["w1"].shape
    g = params["wm1"].shape[0]
    out_ch = params["w2"].shape[1]
    off_wm1, off_wm2, off_w2, off_b, rows = _pk_offsets(in_ch, g, f)
    lw = max(f, out_ch)

    pk = jnp.zeros((rows, lw), f32)
    pk = pk.at[0:in_ch, 0:f].set(params["w1"].astype(f32))
    pk = pk.at[off_wm1:off_wm1 + g, 0:f].set(params["wm1"].astype(f32))
    pk = pk.at[off_wm2:off_wm2 + f, 0:f].set(params["wm2"].astype(f32))
    pk = pk.at[off_w2:off_w2 + f, 0:out_ch].set(params["w2"].astype(f32))
    pk = pk.at[off_b, 0:f].set(params["bm1"].reshape(-1).astype(f32))
    pk = pk.at[off_b + 1, 0:f].set(params["bm2"].reshape(-1).astype(f32))
    pk = pk.at[off_b + 2, 0:out_ch].set(params["b2"].reshape(-1).astype(f32))
    return pk


# ------------------------------- kernel -------------------------------------
def _make_cfconv_kernel(cutoff, in_ch, g, f, out_ch, ns_p, nd_p, e_p):
    log2 = math.log(2.0)
    pi_over_cutoff = math.pi / cutoff
    off_wm1, off_wm2, off_w2, off_b, _ = _pk_offsets(in_ch, g, f)

    def cfconv_kernel(
        x_ref,     # [Ns_p, Cin]  node features (f32)
        ea_ref,    # [E_p, G]     edge_attr (f32)
        ew_ref,    # [E_p, 1]     edge_weight (f32)
        src_ref,   # [E_p, 1]     edge_index[0] (int32, -1 on padded edges)
        dst_ref,   # [1, E_p]     edge_index[1] (int32, -1 on padded edges)
        p_ref,     # [R, L]       packed weights + biases (f32)
        o_ref,     # [Nd_p, Cout]
    ):
        f32 = jnp.float32

        # --- packed parameters: static ref slices (one DMA for all of them) ----
        w1 = p_ref[0:in_ch, 0:f]                          # lin1 weight  [Cin, F]
        wm1 = p_ref[off_wm1:off_wm1 + g, 0:f]             # mlp layer-1  [G,   F]
        wm2 = p_ref[off_wm2:off_wm2 + f, 0:f]             # mlp layer-2  [F,   F]
        w2 = p_ref[off_w2:off_w2 + f, 0:out_ch]           # lin2 weight  [F, Cout]
        bblk = p_ref[off_b:off_b + SUBLANE, :]            # bias rows (aligned slice)
        bm1 = bblk[0:1, 0:f]
        bm2 = bblk[1:2, 0:f]
        b2 = bblk[2:3, 0:out_ch]

        # --- filter network: Linear -> ShiftedSoftplus -> Linear, * cosine cutoff
        ea = ea_ref[...]                                   # [E_p, G]
        h = jnp.dot(ea, wm1, preferred_element_type=f32) + bm1
        h = jax.nn.softplus(h) - log2
        w_filt = jnp.dot(h, wm2, preferred_element_type=f32) + bm2
        c = 0.5 * (jnp.cos(ew_ref[...] * pi_over_cutoff) + 1.0)   # [E_p, 1]
        w_filt = w_filt * c                                # [E_p, F]

        # --- node branch: lin1 first (cheaper than gathering raw features) -----
        xh = jnp.dot(x_ref[...], w1, preferred_element_type=f32)   # [Ns_p, F]

        # --- one-hot gather / scatter masks built in-VMEM (no HBM buffers, no casts
        #     of DMA'd data; padded edges have idx=-1 and never match the iota) -----
        src_oh = (src_ref[...] ==
                  jax.lax.broadcasted_iota(jnp.int32, (e_p, ns_p), 1)).astype(f32)
        dst_oh = (jax.lax.broadcasted_iota(jnp.int32, (nd_p, e_p), 0) ==
                  dst_ref[...]).astype(f32)

        x_j = jnp.dot(src_oh, xh, preferred_element_type=f32)      # gather  [E_p, F]
        x_j = x_j * w_filt
        agg = jnp.dot(dst_oh, x_j, preferred_element_type=f32)     # scatter [Nd_p, F]
        out = jnp.dot(agg, w2, preferred_element_type=f32) + b2
        o_ref[...] = out.astype(o_ref.dtype)

    return cfconv_kernel


def _full_spec(shape):
    nd = len(shape)
    return pl.BlockSpec(shape, lambda i, _nd=nd: (0,) * _nd)


# ------------------------------- wrapper -------------------------------------
def cfconv_pallas(x, edge_index, edge_weight, edge_attr, pk, *,
                  num_filters, out_channels, cutoff=CUTOFF, dim_size=None):
    """Fused CFConv forward. `pk` comes from pack_params() (built once at init)."""
    f32 = jnp.float32
    n_src, in_ch = x.shape
    n_dst = n_src if dim_size is None else dim_size
    n_edges, g = edge_attr.shape
    f = num_filters
    out_ch = out_channels

    # Only the row (sublane) dims need 8-alignment; lane dims stay at natural size
    # because every block is the full array.  With the test sizes nothing is padded.
    ns_p = _round_up(n_src, SUBLANE)
    nd_p = _round_up(n_dst, SUBLANE)
    e_p = _round_up(n_edges, SUBLANE)

    x_in = x.astype(f32)
    if ns_p != n_src:
        x_in = jnp.zeros((ns_p, in_ch), f32).at[:n_src].set(x_in)

    ea_in = edge_attr.astype(f32)
    ew_in = edge_weight.astype(f32).reshape(n_edges, 1)
    src = edge_index[0].astype(jnp.int32).reshape(n_edges, 1)
    dst = edge_index[1].astype(jnp.int32).reshape(1, n_edges)
    if e_p != n_edges:
        ea_in = jnp.zeros((e_p, g), f32).at[:n_edges].set(ea_in)
        ew_in = jnp.zeros((e_p, 1), f32).at[:n_edges].set(ew_in)
        src = jnp.full((e_p, 1), -1, jnp.int32).at[:n_edges].set(src)
        dst = jnp.full((1, e_p), -1, jnp.int32).at[:, :n_edges].set(dst)

    ins = (x_in, ea_in, ew_in, src, dst, pk)
    out_shape = jax.ShapeDtypeStruct((nd_p, out_ch), f32)

    out = pl.pallas_call(
        _make_cfconv_kernel(cutoff, in_ch, g, f, out_ch, ns_p, nd_p, e_p),
        out_shape=out_shape,
        grid=(1,),
        in_specs=[_full_spec(a.shape) for a in ins],
        out_specs=_full_spec(out_shape.shape),
        compiler_params=pltpu.CompilerParams(
            dimension_semantics=("parallel",)),   # future batched axis -> both v7x TCs
    )(*ins)

    if nd_p != n_dst:
        out = out[:n_dst]
    return out


# --------------------------- parameter construction --------------------------
def xavier_uniform(key, fan_in, fan_out):
    bound = math.sqrt(6.0 / (fan_in + fan_out))
    # stored as [fan_in, fan_out] so forward is x @ W
    return jax.random.uniform(key, (fan_in, fan_out), jnp.float32, -bound, bound)


def init_params(key):
    k1, k2, k3, k4, k5 = jax.random.split(key, 5)
    return {
        # lin1: Linear(in_channels, num_filters, bias=False), xavier_uniform
        "w1": xavier_uniform(k1, IN_CH, NUM_FILTERS),
        # mlp = Sequential(Linear(G, F), ShiftedSoftplus, Linear(F, F))  (SchNet default)
        "wm1": xavier_uniform(k2, NUM_GAUSS, NUM_FILTERS),
        "bm1": jax.random.normal(k4, (1, NUM_FILTERS), jnp.float32) * 0.1,
        "wm2": xavier_uniform(k3, NUM_FILTERS, NUM_FILTERS),
        "bm2": jax.random.normal(k5, (1, NUM_FILTERS), jnp.float32) * 0.1,
        # lin2: Linear(num_filters, out_channels), xavier_uniform weight, zero bias
        "w2": xavier_uniform(jax.random.fold_in(k1, 7), NUM_FILTERS, OUT_CH),
        "b2": jnp.zeros((1, OUT_CH), jnp.float32),
    }


# ------------------------------ pure-JAX reference ---------------------------
def cfconv_ref(x, edge_index, edge_weight, edge_attr, params, cutoff=CUTOFF):
    c = 0.5 * (jnp.cos(edge_weight * math.pi / cutoff) + 1.0)
    h = edge_attr @ params["wm1"] + params["bm1"]
    h = jax.nn.softplus(h) - math.log(2.0)
    w = (h @ params["wm2"] + params["bm2"]) * c[:, None]
    xh = x @ params["w1"]
    x_j = xh[edge_index[0]] * w
    # NOTE: if dim_size > x.shape[0] is ever used, update num_segments accordingly.
    agg = jax.ops.segment_sum(x_j, edge_index[1], num_segments=x.shape[0])
    return agg @ params["w2"] + params["b2"]


# ----------------------------------- main ------------------------------------
if __name__ == "__main__":
    key = jax.random.PRNGKey(0)
    kp, kx, ke, kw, ka = jax.random.split(key, 5)

    params = init_params(kp)
    pk = pack_params(params)   # one-time packing, reused across forward calls

    x = jax.random.normal(kx, (N_NODES, IN_CH), jnp.float32)
    edge_index = jax.random.randint(ke, (2, N_EDGES), 0, N_NODES, jnp.int32)
    edge_weight = jax.random.uniform(kw, (N_EDGES,), jnp.float32, 0.1, CUTOFF)
    edge_attr = jax.random.normal(ka, (N_EDGES, NUM_GAUSS), jnp.float32)

    out = cfconv_pallas(x, edge_index, edge_weight, edge_attr, pk,
                        num_filters=NUM_FILTERS, out_channels=OUT_CH)
    out = jax.block_until_ready(out)

    ref = jax.block_until_ready(
        cfconv_ref(x, edge_index, edge_weight, edge_attr, params))

    np.testing.assert_allclose(np.asarray(out), np.asarray(ref), rtol=1e-4, atol=1e-4)
    print("KERNEL_OK")
</pallas_src>

<mosaic_0001>
module attributes {stable_mosaic.version = 11 : i64} {
  func.func @cfconv_kernel(%arg0: i32, %arg1: memref<8x32xf32, #tpu.memory_space<vmem>>, %arg2: memref<16x16xf32, #tpu.memory_space<vmem>>, %arg3: memref<16x1xf32, #tpu.memory_space<vmem>>, %arg4: memref<16x1xi32, #tpu.memory_space<vmem>>, %arg5: memref<1x16xi32, #tpu.memory_space<vmem>>, %arg6: memref<120x32xf32, #tpu.memory_space<vmem>>, %arg7: memref<8x32xf32, #tpu.memory_space<vmem>>) attributes {dimension_semantics = [#tpu.dimension_semantics<parallel>], iteration_bounds = array<i64: 1>, scalar_prefetch = 0 : i64, scratch_operands = 0 : i64, tpu.core_type = #tpu.core_type<tc>, window_params = [{pipeline_mode = #tpu.pipeline_mode<synchronous>, transform_indices = @transform_0, window_bounds = array<i64: 8, 32>}, {pipeline_mode = #tpu.pipeline_mode<synchronous>, transform_indices = @transform_1, window_bounds = array<i64: 16, 16>}, {pipeline_mode = #tpu.pipeline_mode<synchronous>, transform_indices = @transform_2, window_bounds = array<i64: 16, 1>}, {pipeline_mode = #tpu.pipeline_mode<synchronous>, transform_indices = @transform_3, window_bounds = array<i64: 16, 1>}, {pipeline_mode = #tpu.pipeline_mode<synchronous>, transform_indices = @transform_4, window_bounds = array<i64: 1, 16>}, {pipeline_mode = #tpu.pipeline_mode<synchronous>, transform_indices = @transform_5, window_bounds = array<i64: 120, 32>}, {pipeline_mode = #tpu.pipeline_mode<synchronous>, transform_indices = @transform_6, window_bounds = array<i64: 8, 32>}]} {
    %c0 = arith.constant 0 : index
    %c0_0 = arith.constant 0 : index
    %0 = vector.load %arg6[%c0, %c0_0] : memref<120x32xf32, #tpu.memory_space<vmem>>, vector<32x32xf32>
    %c32 = arith.constant 32 : index
    %c0_1 = arith.constant 0 : index
    %1 = vector.load %arg6[%c32, %c0_1] : memref<120x32xf32, #tpu.memory_space<vmem>>, vector<16x32xf32>
    %c48 = arith.constant 48 : index
    %c0_2 = arith.constant 0 : index
    %2 = vector.load %arg6[%c48, %c0_2] : memref<120x32xf32, #tpu.memory_space<vmem>>, vector<32x32xf32>
    %c80 = arith.constant 80 : index
    %c0_3 = arith.constant 0 : index
    %3 = vector.load %arg6[%c80, %c0_3] : memref<120x32xf32, #tpu.memory_space<vmem>>, vector<32x32xf32>
    %c112 = arith.constant 112 : index
    %c0_4 = arith.constant 0 : index
    %4 = vector.load %arg6[%c112, %c0_4] : memref<120x32xf32, #tpu.memory_space<vmem>>, vector<8x32xf32>
    %5 = vector.extract_strided_slice %4 {offsets = [0, 0], sizes = [1, 32], strides = [1, 1]} : vector<8x32xf32> to vector<1x32xf32>
    %6 = vector.extract_strided_slice %4 {offsets = [1, 0], sizes = [1, 32], strides = [1, 1]} : vector<8x32xf32> to vector<1x32xf32>
    %7 = vector.extract_strided_slice %4 {offsets = [2, 0], sizes = [1, 32], strides = [1, 1]} : vector<8x32xf32> to vector<1x32xf32>
    %c0_5 = arith.constant 0 : index
    %c0_6 = arith.constant 0 : index
    %8 = vector.load %arg2[%c0_5, %c0_6] : memref<16x16xf32, #tpu.memory_space<vmem>>, vector<16x16xf32>
    %cst = arith.constant dense<0.000000e+00> : vector<16x32xf32>
    %9 = tpu.matmul %8, %1, %cst {dimension_numbers = #tpu.dot_dimension_numbers<[1], [0], [0], [1], [0, 0, 1, 1], [], []>} : vector<16x16xf32>, vector<16x32xf32>, vector<16x32xf32> -> vector<16x32xf32>
    %10 = vector.broadcast %5 : vector<1x32xf32> to vector<16x32xf32>
    %11 = arith.addf %9, %10 : vector<16x32xf32>
    %cst_7 = arith.constant 0.000000e+00 : f32
    %12 = vector.broadcast %cst_7 : f32 to vector<16x32xf32>
    %13 = arith.maximumf %11, %12 : vector<16x32xf32>
    %14 = vector.broadcast %cst_7 : f32 to vector<16x32xf32>
    %15 = arith.subf %11, %14 : vector<16x32xf32>
    %16 = arith.cmpf one, %15, %15 : vector<16x32xf32>
    %17 = vector.broadcast %cst_7 : f32 to vector<16x32xf32>
    %18 = arith.addf %11, %17 : vector<16x32xf32>
    %19 = math.absf %15 : vector<16x32xf32>
    %cst_8 = arith.constant 0.000000e+00 : f32
    %20 = vector.broadcast %cst_8 : f32 to vector<16x32xf32>
    %21 = arith.subf %20, %19 : vector<16x32xf32>
    %22 = math.exp %21 : vector<16x32xf32>
    %23 = math.log1p %22 : vector<16x32xf32>
    %24 = arith.addf %13, %23 : vector<16x32xf32>
    %25 = arith.select %16, %18, %24 : vector<16x32xi1>, vector<16x32xf32>
    %cst_9 = arith.constant 0.693147182 : f32
    %26 = vector.broadcast %cst_9 : f32 to vector<16x32xf32>
    %27 = arith.subf %25, %26 : vector<16x32xf32>
    %cst_10 = arith.constant dense<0.000000e+00> : vector<16x32xf32>
    %28 = tpu.matmul %27, %2, %cst_10 {dimension_numbers = #tpu.dot_dimension_numbers<[1], [0], [0], [1], [0, 0, 1, 1], [], []>} : vector<16x32xf32>, vector<32x32xf32>, vector<16x32xf32> -> vector<16x32xf32>
    %29 = vector.broadcast %6 : vector<1x32xf32> to vector<16x32xf32>
    %30 = arith.addf %28, %29 : vector<16x32xf32>
    %c0_11 = arith.constant 0 : index
    %c0_12 = arith.constant 0 : index
    %31 = vector.load %arg3[%c0_11, %c0_12] : memref<16x1xf32, #tpu.memory_space<vmem>>, vector<16x1xf32>
    %cst_13 = arith.constant 0.628318548 : f32
    %32 = vector.broadcast %cst_13 : f32 to vector<16x1xf32>
    %33 = arith.mulf %31, %32 : vector<16x1xf32>
    %34 = math.cos %33 : vector<16x1xf32>
    %cst_14 = arith.constant 1.000000e+00 : f32
    %35 = vector.broadcast %cst_14 : f32 to vector<16x1xf32>
    %36 = arith.addf %34, %35 : vector<16x1xf32>
    %cst_15 = arith.constant 5.000000e-01 : f32
    %37 = vector.broadcast %cst_15 : f32 to vector<16x1xf32>
    %38 = arith.mulf %37, %36 : vector<16x1xf32>
    %39 = vector.broadcast %38 : vector<16x1xf32> to vector<16x32xf32>
    %40 = arith.mulf %30, %39 : vector<16x32xf32>
    %c0_16 = arith.constant 0 : index
    %c0_17 = arith.constant 0 : index
    %41 = vector.load %arg1[%c0_16, %c0_17] : memref<8x32xf32, #tpu.memory_space<vmem>>, vector<8x32xf32>
    %cst_18 = arith.constant dense<0.000000e+00> : vector<8x32xf32>
    %42 = tpu.matmul %41, %0, %cst_18 {dimension_numbers = #tpu.dot_dimension_numbers<[1], [0], [0], [1], [0, 0, 1, 1], [], []>} : vector<8x32xf32>, vector<32x32xf32>, vector<8x32xf32> -> vector<8x32xf32>
    %c0_19 = arith.constant 0 : index
    %c0_20 = arith.constant 0 : index
    %43 = vector.load %arg4[%c0_19, %c0_20] : memref<16x1xi32, #tpu.memory_space<vmem>>, vector<16x1xi32>
    %44 = tpu.iota {dimensions = array<i32: 1>} : vector<16x8xi32>
    %45 = vector.broadcast %43 : vector<16x1xi32> to vector<16x8xi32>
    %46 = arith.cmpi eq, %45, %44 : vector<16x8xi32>
    %47 = arith.extui %46 : vector<16x8xi1> to vector<16x8xi32>
    %48 = arith.sitofp %47 : vector<16x8xi32> to vector<16x8xf32>
    %49 = tpu.iota {dimensions = array<i32: 0>} : vector<8x16xi32>
    %c0_21 = arith.constant 0 : index
    %c0_22 = arith.constant 0 : index
    %50 = vector.load %arg5[%c0_21, %c0_22] : memref<1x16xi32, #tpu.memory_space<vmem>>, vector<1x16xi32>
    %51 = vector.broadcast %50 : vector<1x16xi32> to vector<8x16xi32>
    %52 = arith.cmpi eq, %49, %51 : vector<8x16xi32>
    %53 = arith.extui %52 : vector<8x16xi1> to vector<8x16xi32>
    %54 = arith.sitofp %53 : vector<8x16xi32> to vector<8x16xf32>
    %cst_23 = arith.constant dense<0.000000e+00> : vector<16x32xf32>
    %55 = tpu.matmul %48, %42, %cst_23 {dimension_numbers = #tpu.dot_dimension_numbers<[1], [0], [0], [1], [0, 0, 1, 1], [], []>} : vector<16x8xf32>, vector<8x32xf32>, vector<16x32xf32> -> vector<16x32xf32>
    %56 = arith.mulf %55, %40 : vector<16x32xf32>
    %cst_24 = arith.constant dense<0.000000e+00> : vector<8x32xf32>
    %57 = tpu.matmul %54, %56, %cst_24 {dimension_numbers = #tpu.dot_dimension_numbers<[1], [0], [0], [1], [0, 0, 1, 1], [], []>} : vector<8x16xf32>, vector<16x32xf32>, vector<8x32xf32> -> vector<8x32xf32>
    %cst_25 = arith.constant dense<0.000000e+00> : vector<8x32xf32>
    %58 = tpu.matmul %57, %3, %cst_25 {dimension_numbers = #tpu.dot_dimension_numbers<[1], [0], [0], [1], [0, 0, 1, 1], [], []>} : vector<8x32xf32>, vector<32x32xf32>, vector<8x32xf32> -> vector<8x32xf32>
    %59 = vector.broadcast %7 : vector<1x32xf32> to vector<8x32xf32>
    %60 = arith.addf %58, %59 : vector<8x32xf32>
    %c0_26 = arith.constant 0 : index
    %c0_27 = arith.constant 0 : index
    %61 = vector.load %arg7[%c0_26, %c0_27] : memref<8x32xf32, #tpu.memory_space<vmem>>, vector<8x32xf32>
    tpu.vector_store %arg7[%c0_26, %c0_27], %60 {strides = array<i32>} : memref<8x32xf32, #tpu.memory_space<vmem>>, vector<8x32xf32>,
    return
  }
  func.func @transform_0(%arg0: i32) -> (i32, i32) {
    %c0_i32 = arith.constant 0 : i32
    %c0_i32_0 = arith.constant 0 : i32
    %c0_i32_1 = arith.constant 0 : i32
    return %c0_i32, %c0_i32_0 : i32, i32
  }
  func.func @transform_1(%arg0: i32) -> (i32, i32) {
    %c0_i32 = arith.constant 0 : i32
    %c0_i32_0 = arith.constant 0 : i32
    %c0_i32_1 = arith.constant 0 : i32
    return %c0_i32, %c0_i32_0 : i32, i32
  }
  func.func @transform_2(%arg0: i32) -> (i32, i32) {
    %c0_i32 = arith.constant 0 : i32
    %c0_i32_0 = arith.constant 0 : i32
    %c0_i32_1 = arith.constant 0 : i32
    return %c0_i32, %c0_i32_0 : i32, i32
  }
  func.func @transform_3(%arg0: i32) -> (i32, i32) {
    %c0_i32 = arith.constant 0 : i32
    %c0_i32_0 = arith.constant 0 : i32
    %c0_i32_1 = arith.constant 0 : i32
    return %c0_i32, %c0_i32_0 : i32, i32
  }
  func.func @transform_4(%arg0: i32) -> (i32, i32) {
    %c0_i32 = arith.constant 0 : i32
    %c0_i32_0 = arith.constant 0 : i32
    %c0_i32_1 = arith.constant 0 : i32
    return %c0_i32, %c0_i32_0 : i32, i32
  }
  func.func @transform_5(%arg0: i32) -> (i32, i32) {
    %c0_i32 = arith.constant 0 : i32
    %c0_i32_0 = arith.constant 0 : i32
    %c0_i32_1 = arith.constant 0 : i32
    return %c0_i32, %c0_i32_0 : i32, i32
  }
  func.func @transform_6(%arg0: i32) -> (i32, i32) {
    %c0_i32 = arith.constant 0 : i32
    %c0_i32_0 = arith.constant 0 : i32
    %c0_i32_1 = arith.constant 0 : i32
    return %c0_i32, %c0_i32_0 : i32, i32
  }
}

</mosaic_0001>

<llo_original>
// kernel: tpu_custom_call.1
$region0: #{tpu_custom_call.1}
  #allocation0 [shape = 'u32[]', space=smem, size = 0x4, offset = 0x4, fixed_abs, tag = 'smem constant byte address 0x4 - core index']
  #allocation1 [shape = 'u32[144,128]{1,0:T(1,128)}', space=vmem, size = 0x12000, scoped, tag = 'internal scratch']
  %s0 = inlined_call_operand.vmem [shape: f32[8,32], index: 0, kind: input, shape index: {}]
  %s1 = inlined_call_operand.vmem [shape: f32[16,16], index: 1, kind: input, shape index: {}]
  %s2 = inlined_call_operand.vmem [shape: f32[16,1], index: 2, kind: input, shape index: {}]
  %s3 = inlined_call_operand.vmem [shape: s32[16,1], index: 3, kind: input, shape index: {}]
  %s4 = inlined_call_operand.vmem [shape: s32[1,16], index: 4, kind: input, shape index: {}]
  %s5 = inlined_call_operand.vmem [shape: f32[120,32], index: 5, kind: input, shape index: {}]
  %s6 = inlined_call_operand.hbm [shape: f32[8,32], index: 6, kind: output, shape index: {}]
  %s7 = sld [smem:[#allocation0]]
  $region34: #{tpu_custom_call.1} parent=0
    _
  %s9 = ssub.s32 1, %s7
  %s10 = scalar_select 0, %s9, %s7
  $region1: #{tpu_custom_call.1} parent=0
    #allocation2 [shape = 'u8[4096]{0}', space=vmem, size = 0x1000, scoped, tag = 'output window, operand 0, single buffered']
    #allocation3 [shape = 's32[1]{0}', space=sflag, size = 0x4, scoped, tag = 'scoped memory for tpu_custom_call.1']
    %11 = vsyncpa [#allocation3], 0
    // Predicated region
    $region2: #{tpu_custom_call.1} parent=1 // pred_check
      _
    $region3: #{tpu_custom_call.1} parent=1 // pred_check_branch
      %13 = sbr.rel (0) target = $region5
    $region4: #{tpu_custom_call.1} parent=1 // pred_region
      _
    $region5: #{tpu_custom_call.1} parent=1 // pred_fallthru
      _
    // Predicated region
    $region6: #{tpu_custom_call.1} parent=1 // pred_check
      _
    $region7: #{tpu_custom_call.1} parent=1 // pred_check_branch
      %15 = sbr.rel (0) target = $region9
    $region8: #{tpu_custom_call.1} parent=1 // pred_region
      _
    $region9: #{tpu_custom_call.1} parent=1 // pred_fallthru
      _
    // Predicated region
    $region10: #{tpu_custom_call.1} parent=1 // pred_check
      _
    $region11: #{tpu_custom_call.1} parent=1 // pred_check_branch
      %17 = sbr.rel (0) target = $region13
    $region12: #{tpu_custom_call.1} parent=1 // pred_region
      _
    $region13: #{tpu_custom_call.1} parent=1 // pred_fallthru
      _
    // Predicated region
    $region14: #{tpu_custom_call.1} parent=1 // pred_check
      _
    $region15: #{tpu_custom_call.1} parent=1 // pred_check_branch
      %19 = sbr.rel (0) target = $region17
    $region16: #{tpu_custom_call.1} parent=1 // pred_region
      _
    $region17: #{tpu_custom_call.1} parent=1 // pred_fallthru
      _
    // Predicated region
    $region18: #{tpu_custom_call.1} parent=1 // pred_check
      _
    $region19: #{tpu_custom_call.1} parent=1 // pred_check_branch
      %21 = sbr.rel (0) target = $region21
    $region20: #{tpu_custom_call.1} parent=1 // pred_region
      _
    $region21: #{tpu_custom_call.1} parent=1 // pred_fallthru
      _
    // Predicated region
    $region22: #{tpu_custom_call.1} parent=1 // pred_check
      _
    $region23: #{tpu_custom_call.1} parent=1 // pred_check_branch
      %23 = sbr.rel (0) target = $region25
    $region24: #{tpu_custom_call.1} parent=1 // pred_region
      _
    $region25: #{tpu_custom_call.1} parent=1 // pred_fallthru
      _
    %v24 = vld [vmem:[%s5] sm:$0xff]
    %v25 = vld [vmem:[%s5 + $0x8] sm:$0xff]
    %v26 = vld [vmem:[%s5 + $0x10] sm:$0xff]
    %v27 = vld [vmem:[%s5 + $0x18] sm:$0xff]
    %v28 = vld [vmem:[%s5 + $0x20] sm:$0xff]
    %v29 = vld [vmem:[%s5 + $0x28] sm:$0xff]
    %v30 = vld [vmem:[%s5 + $0x30] sm:$0xff]
    %v31 = vld [vmem:[%s5 + $0x38] sm:$0xff]
    %v32 = vld [vmem:[%s5 + $0x40] sm:$0xff]
    %v33 = vld [vmem:[%s5 + $0x48] sm:$0xff]
    %v34 = vld [vmem:[%s5 + $0x50] sm:$0xff]
    %v35 = vld [vmem:[%s5 + $0x58] sm:$0xff]
    %v36 = vld [vmem:[%s5 + $0x60] sm:$0xff]
    %v37 = vld [vmem:[%s5 + $0x68] sm:$0xff]
    %v38 = vld [vmem:[%s5 + $0x70] sm:$0xff]
    %v39 = vld [vmem:[%s1] sm:$0xff]
    %v40 = vld [vmem:[%s1 + $0x8] sm:$0xff]
    %v41 = vlaneseq
    %v42 = vshrl.u32 %v41, 7
    %v43 = vsub.s32 0, %v42
    %v44 = vrot.slane %v38, %v43
    %vm45 = vcmask 130048
    %v47 = vsel %vm45, %v39, 0
    %v50 = vsel %vm45, %v40, 0
    %52 = vmatprep.subr.mxu0 0.0
    %53 = vmatpush1.msra.mxu0 0.0
    %54 = vmatprep.subr.mxu0 0.0
    %55 = vmatpush1.msra.mxu0 0.0
    %56 = vmatprep.subr.mxu0 0.0
    %57 = vmatpush1.msra.mxu0 0.0
    %58 = vmatprep.subr.mxu0 0.0
    %59 = vmatpush1.msra.mxu0 0.0
    %60 = vmatprep.subr.mxu0 0.0
    %61 = vmatpush1.msra.mxu0 0.0
    %62 = vmatprep.subr.mxu0 0.0
    %63 = vmatpush1.msra.mxu0 0.0
    %64 = vmatprep.subr.mxu0 0.0
    %65 = vmatpush1.msra.mxu0 0.0
    %66 = vmatprep.subr.mxu0 0.0
    %67 = vmatpush1.msra.mxu0 0.0
    %68 = vmatprep.subr.mxu0 0.0
    %69 = vmatpush1.msra.mxu0 0.0
    %70 = vmatprep.subr.mxu0 0.0
    %71 = vmatpush1.msra.mxu0 0.0
    %72 = vmatprep.subr.mxu0 0.0
    %73 = vmatpush1.msra.mxu0 0.0
    %74 = vmatprep.subr.mxu0 0.0
    %75 = vmatpush1.msra.mxu0 0.0
    %76 = vmatprep.subr.mxu0 0.0
    %77 = vmatpush1.msra.mxu0 0.0
    %78 = vmatprep.subr.mxu0 0.0
    %79 = vmatpush1.msra.mxu0 0.0
    %80 = vmatprep.subr.mxu0 0.0
    %81 = vmatpush1.msra.mxu0 %v29
    %82 = vmatprep.subr.mxu0 0.0
    %83 = vmatpush1.msra.mxu0 %v28
    %84 = vmatprep.subr.mxu0 0.0
    %85 = vmatpush2.msra.mxu0 0.0
    %86 = vmatprep.subr.mxu0 0.0
    %87 = vmatpush2.msra.mxu0 0.0
    %88 = vmatprep.subr.mxu0 0.0
    %89 = vmatpush2.msra.mxu0 0.0
    %90 = vmatprep.subr.mxu0 0.0
    %91 = vmatpush2.msra.mxu0 0.0
    %92 = vmatprep.subr.mxu0 0.0
    %93 = vmatpush2.msra.mxu0 0.0
    %94 = vmatprep.subr.mxu0 0.0
    %95 = vmatpush2.msra.mxu0 0.0
    %96 = vmatprep.subr.mxu0 0.0
    %97 = vmatpush2.msra.mxu0 0.0
    %98 = vmatprep.subr.mxu0 0.0
    %99 = vmatpush2.msra.mxu0 0.0
    %100 = vmatprep.subr.mxu0 0.0
    %101 = vmatpush2.msra.mxu0 0.0
    %102 = vmatprep.subr.mxu0 0.0
    %103 = vmatpush2.msra.mxu0 0.0
    %104 = vmatprep.subr.mxu0 0.0
    %105 = vmatpush2.msra.mxu0 0.0
    %106 = vmatprep.subr.mxu0 0.0
    %107 = vmatpush2.msra.mxu0 0.0
    %108 = vmatprep.subr.mxu0 0.0
    %109 = vmatpush2.msra.mxu0 0.0
    %110 = vmatprep.subr.mxu0 0.0
    %111 = vmatpush2.msra.mxu0 0.0
    %112 = vmatprep.subr.mxu0 0.0
    %113 = vmatpush2.msra.mxu0 0.0
    %114 = vmatprep.subr.mxu0 0.0
    %115 = vmatpush2.msra.mxu0 0.0
    %116 = vmatprep.mubr.f32.mxu0 0.0
    %117 = vmatmul.mubr.f32.gmra.mxu0 %v47
    %v118 = vpop.f32.mrf.mxu0
    %v119 = vadd.f32 %v44, %v118
    %v120 = vpop.f32.mrf.mxu0
    %121 = vmatprep.mubr.f32.mxu0 0.0
    %122 = vmatmul.mubr.f32.gmra.mxu0 %v50
    %v123 = vpop.f32.mrf.mxu0
    %v124 = vadd.f32 %v44, %v123
    %v125 = vpop.f32.mrf.mxu0
    %126 = vdwg.mxu0
    %v127 = vmax.f32 %v119, 0.0
    %v128 = vmax.f32 %v124, 0.0
    %vm129 = vcmp.ne.f32.partialorder %v119, %v119
    %vm130 = vcmp.ne.f32.partialorder %v124, %v124
    %v131 = vadd.f32 %v119, 0.0
    %v132 = vadd.f32 %v124, 0.0
    %v133 = vand.u32 2147483647, %v119
    %v134 = vand.u32 2147483647, %v124
    %v135 = vsub.f32 0.0, %v133
    %v136 = vsub.f32 0.0, %v134
    %v137 = vmul.f32 %v135, 1.442695
    %v138 = vpow.pop %v137
    %v139 = vmul.f32 %v136, 1.442695
    %v140 = vpow.pop %v139
    %v141 = vadd.f32 %v138, 1.0
    %v142 = vlog2.pop %v141
    %v143 = vmul.f32 %v142, 0.6931472
    %v144 = vmul.f32 -0.5, %v138
    %v145 = vadd.f32 %v144, 1.0
    %v146 = vmul.f32 %v145, %v138
    %v147 = vand.u32 2147483647, %v138
    %vm148 = vcmp.lt.f32.partialorder %v147, 0.0004427343
    %v149 = vsel %vm148, %v146, %v143
    %v150 = vadd.f32 %v140, 1.0
    %v151 = vlog2.pop %v150
    %v152 = vmul.f32 %v151, 0.6931472
    %v153 = vmul.f32 -0.5, %v140
    %v154 = vadd.f32 %v153, 1.0
    %v155 = vmul.f32 %v154, %v140
    %v156 = vand.u32 2147483647, %v140
    %vm157 = vcmp.lt.f32.partialorder %v156, 0.0004427343
    %v158 = vsel %vm157, %v155, %v152
    %v159 = vadd.f32 %v127, %v149
    %v160 = vadd.f32 %v128, %v158
    %v161 = vsel %vm129, %v131, %v159
    %v162 = vsel %vm130, %v132, %v160
    %v163 = vsub.f32 %v161, 0.6931472
    %v164 = vsub.f32 %v162, 0.6931472
    %v165 = vlaneseq
    %v166 = vshrl.u32 %v165, 7
    %v167 = vsub.s32 1, %v166
    %v168 = vrot.slane %v38, %v167
    %vm169 = vcmask 261120
    %v171 = vsel %vm169, %v163, 0
    %v174 = vsel %vm169, %v164, 0
    %176 = vmatprep.subr.mxu0 0.0
    %177 = vmatpush1.msra.mxu0 0.0
    %178 = vmatprep.subr.mxu0 0.0
    %179 = vmatpush1.msra.mxu0 0.0
    %180 = vmatprep.subr.mxu0 0.0
    %181 = vmatpush1.msra.mxu0 0.0
    %182 = vmatprep.subr.mxu0 0.0
    %183 = vmatpush1.msra.mxu0 0.0
    %184 = vmatprep.subr.mxu0 0.0
    %185 = vmatpush1.msra.mxu0 0.0
    %186 = vmatprep.subr.mxu0 0.0
    %187 = vmatpush1.msra.mxu0 0.0
    %188 = vmatprep.subr.mxu0 0.0
    %189 = vmatpush1.msra.mxu0 0.0
    %190 = vmatprep.subr.mxu0 0.0
    %191 = vmatpush1.msra.mxu0 0.0
    %192 = vmatprep.subr.mxu0 0.0
    %193 = vmatpush1.msra.mxu0 0.0
    %194 = vmatprep.subr.mxu0 0.0
    %195 = vmatpush1.msra.mxu0 0.0
    %196 = vmatprep.subr.mxu0 0.0
    %197 = vmatpush1.msra.mxu0 0.0
    %198 = vmatprep.subr.mxu0 0.0
    %199 = vmatpush1.msra.mxu0 0.0
    %200 = vmatprep.subr.mxu0 0.0
    %201 = vmatpush1.msra.mxu0 %v33
    %202 = vmatprep.subr.mxu0 0.0
    %203 = vmatpush1.msra.mxu0 %v32
    %204 = vmatprep.subr.mxu0 0.0
    %205 = vmatpush1.msra.mxu0 %v31
    %206 = vmatprep.subr.mxu0 0.0
    %207 = vmatpush1.msra.mxu0 %v30
    %208 = vmatprep.subr.mxu0 0.0
    %209 = vmatpush2.msra.mxu0 0.0
    %210 = vmatprep.subr.mxu0 0.0
    %211 = vmatpush2.msra.mxu0 0.0
    %212 = vmatprep.subr.mxu0 0.0
    %213 = vmatpush2.msra.mxu0 0.0
    %214 = vmatprep.subr.mxu0 0.0
    %215 = vmatpush2.msra.mxu0 0.0
    %216 = vmatprep.subr.mxu0 0.0
    %217 = vmatpush2.msra.mxu0 0.0
    %218 = vmatprep.subr.mxu0 0.0
    %219 = vmatpush2.msra.mxu0 0.0
    %220 = vmatprep.subr.mxu0 0.0
    %221 = vmatpush2.msra.mxu0 0.0
    %222 = vmatprep.subr.mxu0 0.0
    %223 = vmatpush2.msra.mxu0 0.0
    %224 = vmatprep.subr.mxu0 0.0
    %225 = vmatpush2.msra.mxu0 0.0
    %226 = vmatprep.subr.mxu0 0.0
    %227 = vmatpush2.msra.mxu0 0.0
    %228 = vmatprep.subr.mxu0 0.0
    %229 = vmatpush2.msra.mxu0 0.0
    %230 = vmatprep.subr.mxu0 0.0
    %231 = vmatpush2.msra.mxu0 0.0
    %232 = vmatprep.subr.mxu0 0.0
    %233 = vmatpush2.msra.mxu0 0.0
    %234 = vmatprep.subr.mxu0 0.0
    %235 = vmatpush2.msra.mxu0 0.0
    %236 = vmatprep.subr.mxu0 0.0
    %237 = vmatpush2.msra.mxu0 0.0
    %238 = vmatprep.subr.mxu0 0.0
    %239 = vmatpush2.msra.mxu0 0.0
    %240 = vmatprep.mubr.f32.mxu0 0.0
    %241 = vmatmul.mubr.f32.gmra.mxu0 %v171
    %v242 = vpop.f32.mrf.mxu0
    %v243 = vadd.f32 %v168, %v242
    %v244 = vpop.f32.mrf.mxu0
    %245 = vmatprep.mubr.f32.mxu0 0.0
    %246 = vmatmul.mubr.f32.gmra.mxu0 %v174
    %v247 = vpop.f32.mrf.mxu0
    %v248 = vadd.f32 %v168, %v247
    %v249 = vpop.f32.mrf.mxu0
    %250 = vdwg.mxu0
    %v251 = vld [vmem:[%s2] sm:$0xff]
    %v252 = vld [vmem:[%s2 + $0x8] sm:$0xff]
    %v253 = vmul.f32 %v251, 0.62831855
    %v254 = vmul.f32 %v252, 0.62831855
    %v255 = vand.u32 2147483647, %v253
    %vm256 = vcmp.le.f32.partialorder %v255, 0.7853982
    %vm257 = vcmp.lt.s32.totalorder %v253, 0
    %v258 = vand.u32 %v253, 2139095040
    %v259 = vshrl.u32 %v258, 23
    %v260 = vsub.s32 %v259, 127
    %v261 = vand.u32 2147483647, %v253
    %v262 = vand.u32 %v261, 8388607
    %v263 = vor.u32 %v262, 8388608
    %v264 = vsub.s32 0, %v263
    %v265 = vadd.s32 %v260, 1
    %vm266 = vcmp.gt.s32.totalorder %v265, 0
    %v267 = vsel %vm266, %v265, 0
    %v268 = vshrl.u32 %v267, 5
    %v269 = vand.u32 %v267, 31
    %v270 = vsub.s32 32, %v269
    %v271 = vshrl.u32 683565275, %v270
    %v272 = vshll.u32 683565275, %v269
    %v273 = vshrl.u32 2475754826, %v270
    %v274 = vor.u32 %v272, %v273
    %v275 = vshll.u32 2475754826, %v269
    %v276 = vshrl.u32 2131351028, %v270
    %v277 = vor.u32 %v275, %v276
    %v278 = vshll.u32 2131351028, %v269
    %v279 = vshrl.u32 2102212464, %v270
    %v280 = vor.u32 %v278, %v279
    %v281 = vshll.u32 2102212464, %v269
    %v282 = vshrl.u32 920167782, %v270
    %v283 = vor.u32 %v281, %v282
    %v284 = vshll.u32 920167782, %v269
    %v285 = vshrl.u32 1326507024, %v270
    %v286 = vor.u32 %v284, %v285
    %vm287 = vcmp.lt.s32.totalorder %v268, 1
    %vm288 = vcmp.lt.s32.totalorder %v268, 2
    %vm289 = vcmp.lt.s32.totalorder %v268, 3
    %vm290 = vcmp.lt.s32.totalorder %v268, 4
    %v291 = vsel %vm287, %v271, %v274
    %v292 = vsel %vm290, %v280, 2102212464
    %v293 = vsel %vm289, %v277, %v292
    %v294 = vsel %vm288, %v291, %v293
    %v295 = vsel %vm287, %v274, %v277
    %v296 = vsel %vm290, %v283, 920167782
    %v297 = vsel %vm289, %v280, %v296
    %v298 = vsel %vm288, %v295, %v297
    %v299 = vsel %vm287, %v277, %v280
    %v300 = vsel %vm290, %v286, 1326507024
    %v301 = vsel %vm289, %v283, %v300
    %v302 = vsel %vm288, %v299, %v301
    %v303 = vshll.u32 %v263, 8
    %v304 = vmul.u32.u64.compose %v303, %v302
    %v305 = vextract.low.u32 %v304
    %v306 = vextract.high.u32 %v304
    %v307 = vmul.u32.u64.compose %v303, %v298
    %v308 = vextract.low.u32 %v307
    %v309 = vextract.high.u32 %v307
    %v310 = vmul.u32 %v303, %v294
    %v311 = vadd.s32 %v306, %v308
    %vm312 = vc.u32 %v306, %v308
    %v313 = vadd.s32 %v309, 1
    %v314 = vsel %vm312, %v313, %v309
    %v315 = vadd.s32 %v310, %v314
    %v316 = vadd.s32 %v315, 536870912
    %v317 = vshrl.u32 %v316, 30
    %v318 = vshll.u32 %v317, 30
    %v319 = vsub.s32 %v315, %v318
    %vm320 = vcmp.lt.s32.totalorder %v319, 0
    %v321 = vsub.s32 0, %v319
    %v322 = vsel %vm320, %v321, %v319
    %v323 = vclz %v322
    %v324 = vsub.s32 %v323, 2
    %vm325 = vcmp.gt.s32.totalorder 0, %v324
    %v326 = vsel %vm325, 0, %v324
    %v327 = vsub.s32 32, %v326
    %v328 = vshll.u32 %v319, %v326
    %v329 = vshrl.u32 %v311, %v327
    %v330 = vor.u32 %v328, %v329
    %v331 = vsub.s32 4294967266, %v326
    %v332 = vadd.s32 %v331, 127
    %v333 = vshll.u32 %v332, 23
    %v334 = vor.u32 4788187, %v333
    %v335 = vand.u32 2147483647, %v334
    %v337 = vcvt.s32.f32 %v330
    %v338 = vmul.f32 %v337, %v335
    %v339 = vxor.u32 %v338, 2147483648
    %v340 = vsel %vm257, %v339, %v338
    %v341 = vsub.s32 4, %v317
    %v342 = vsel %vm257, %v341, %v317
    %v343 = vsel %vm256, %v253, %v340
    %v344 = vsel %vm256, 0, %v342
    %v345 = vcosq.f32.pop %v343
    %v346 = vsinq.f32.pop %v343
    %vm347 = vweird.f32 %v253
    %v348 = vand.u32 %v344, 3
    %vm349 = vcmp.lt.s32.totalorder %v348, 2
    %vm350 = vcmp.eq.s32.totalorder %v348, 0
    %v351 = vxor.u32 %v346, 2147483648
    %v352 = vsel %vm350, %v345, %v351
    %vm353 = vcmp.eq.s32.totalorder %v348, 2
    %v354 = vxor.u32 %v345, 2147483648
    %v355 = vsel %vm353, %v354, %v346
    %v356 = vsel %vm349, %v352, %v355
    %v357 = vsel %vm347, nan, %v356
    %v358 = vand.u32 2147483647, %v254
    %vm359 = vcmp.le.f32.partialorder %v358, 0.7853982
    %vm360 = vcmp.lt.s32.totalorder %v254, 0
    %v361 = vand.u32 %v254, 2139095040
    %v362 = vshrl.u32 %v361, 23
    %v363 = vsub.s32 %v362, 127
    %v364 = vand.u32 2147483647, %v254
    %v365 = vand.u32 %v364, 8388607
    %v366 = vor.u32 %v365, 8388608
    %v367 = vsub.s32 0, %v366
    %v368 = vadd.s32 %v363, 1
    %vm369 = vcmp.gt.s32.totalorder %v368, 0
    %v370 = vsel %vm369, %v368, 0
    %v371 = vshrl.u32 %v370, 5
    %v372 = vand.u32 %v370, 31
    %v373 = vsub.s32 32, %v372
    %v374 = vshrl.u32 683565275, %v373
    %v375 = vshll.u32 683565275, %v372
    %v376 = vshrl.u32 2475754826, %v373
    %v377 = vor.u32 %v375, %v376
    %v378 = vshll.u32 2475754826, %v372
    %v379 = vshrl.u32 2131351028, %v373
    %v380 = vor.u32 %v378, %v379
    %v381 = vshll.u32 2131351028, %v372
    %v382 = vshrl.u32 2102212464, %v373
    %v383 = vor.u32 %v381, %v382
    %v384 = vshll.u32 2102212464, %v372
    %v385 = vshrl.u32 920167782, %v373
    %v386 = vor.u32 %v384, %v385
    %v387 = vshll.u32 920167782, %v372
    %v388 = vshrl.u32 1326507024, %v373
    %v389 = vor.u32 %v387, %v388
    %vm390 = vcmp.lt.s32.totalorder %v371, 1
    %vm391 = vcmp.lt.s32.totalorder %v371, 2
    %vm392 = vcmp.lt.s32.totalorder %v371, 3
    %vm393 = vcmp.lt.s32.totalorder %v371, 4
    %v394 = vsel %vm390, %v374, %v377
    %v395 = vsel %vm393, %v383, 2102212464
    %v396 = vsel %vm392, %v380, %v395
    %v397 = vsel %vm391, %v394, %v396
    %v398 = vsel %vm390, %v377, %v380
    %v399 = vsel %vm393, %v386, 920167782
    %v400 = vsel %vm392, %v383, %v399
    %v401 = vsel %vm391, %v398, %v400
    %v402 = vsel %vm390, %v380, %v383
    %v403 = vsel %vm393, %v389, 1326507024
    %v404 = vsel %vm392, %v386, %v403
    %v405 = vsel %vm391, %v402, %v404
    %v406 = vshll.u32 %v366, 8
    %v407 = vmul.u32.u64.compose %v406, %v405
    %v408 = vextract.low.u32 %v407
    %v409 = vextract.high.u32 %v407
    %v410 = vmul.u32.u64.compose %v406, %v401
    %v411 = vextract.low.u32 %v410
    %v412 = vextract.high.u32 %v410
    %v413 = vmul.u32 %v406, %v397
    %v414 = vadd.s32 %v409, %v411
    %vm415 = vc.u32 %v409, %v411
    %v416 = vadd.s32 %v412, 1
    %v417 = vsel %vm415, %v416, %v412
    %v418 = vadd.s32 %v413, %v417
    %v419 = vadd.s32 %v418, 536870912
    %v420 = vshrl.u32 %v419, 30
    %v421 = vshll.u32 %v420, 30
    %v422 = vsub.s32 %v418, %v421
    %vm423 = vcmp.lt.s32.totalorder %v422, 0
    %v424 = vsub.s32 0, %v422
    %v425 = vsel %vm423, %v424, %v422
    %v426 = vclz %v425
    %v427 = vsub.s32 %v426, 2
    %vm428 = vcmp.gt.s32.totalorder 0, %v427
    %v429 = vsel %vm428, 0, %v427
    %v430 = vsub.s32 32, %v429
    %v431 = vshll.u32 %v422, %v429
    %v432 = vshrl.u32 %v414, %v430
    %v433 = vor.u32 %v431, %v432
    %v434 = vsub.s32 4294967266, %v429
    %v435 = vadd.s32 %v434, 127
    %v436 = vshll.u32 %v435, 23
    %v437 = vor.u32 4788187, %v436
    %v438 = vand.u32 2147483647, %v437
    %v440 = vcvt.s32.f32 %v433
    %v441 = vmul.f32 %v440, %v438
    %v442 = vxor.u32 %v441, 2147483648
    %v443 = vsel %vm360, %v442, %v441
    %v444 = vsub.s32 4, %v420
    %v445 = vsel %vm360, %v444, %v420
    %v446 = vsel %vm359, %v254, %v443
    %v447 = vsel %vm359, 0, %v445
    %v448 = vcosq.f32.pop %v446
    %v449 = vsinq.f32.pop %v446
    %vm450 = vweird.f32 %v254
    %v451 = vand.u32 %v447, 3
    %vm452 = vcmp.lt.s32.totalorder %v451, 2
    %vm453 = vcmp.eq.s32.totalorder %v451, 0
    %v454 = vxor.u32 %v449, 2147483648
    %v455 = vsel %vm453, %v448, %v454
    %vm456 = vcmp.eq.s32.totalorder %v451, 2
    %v457 = vxor.u32 %v448, 2147483648
    %v458 = vsel %vm456, %v457, %v449
    %v459 = vsel %vm452, %v455, %v458
    %v460 = vsel %vm450, nan, %v459
    %v461 = vadd.f32 %v357, 1.0
    %v462 = vadd.f32 %v460, 1.0
    %v463 = vmul.f32 %v461, 0.5
    %v464 = vmul.f32 %v462, 0.5
    %466 = vset.pattern.permute.xlu0 0
    %467 = vperm.xlu0 %466, %v463
    %v468 = vpop.permute.xlu0 %467
    %471 = vset.pattern.permute.xlu0 0
    %472 = vperm.xlu0 %471, %v464
    %v473 = vpop.permute.xlu0 %472
    %v475 = vmul.f32 %v243, %v468
    %v476 = vmul.f32 %v248, %v473
    %v477 = vld [vmem:[%s0] sm:$0xff]
    %v479 = vsel %vm169, %v477, 0
    %481 = vmatprep.subr.mxu0 0.0
    %482 = vmatpush1.msra.mxu0 0.0
    %483 = vmatprep.subr.mxu0 0.0
    %484 = vmatpush1.msra.mxu0 0.0
    %485 = vmatprep.subr.mxu0 0.0
    %486 = vmatpush1.msra.mxu0 0.0
    %487 = vmatprep.subr.mxu0 0.0
    %488 = vmatpush1.msra.mxu0 0.0
    %489 = vmatprep.subr.mxu0 0.0
    %490 = vmatpush1.msra.mxu0 0.0
    %491 = vmatprep.subr.mxu0 0.0
    %492 = vmatpush1.msra.mxu0 0.0
    %493 = vmatprep.subr.mxu0 0.0
    %494 = vmatpush1.msra.mxu0 0.0
    %495 = vmatprep.subr.mxu0 0.0
    %496 = vmatpush1.msra.mxu0 0.0
    %497 = vmatprep.subr.mxu0 0.0
    %498 = vmatpush1.msra.mxu0 0.0
    %499 = vmatprep.subr.mxu0 0.0
    %500 = vmatpush1.msra.mxu0 0.0
    %501 = vmatprep.subr.mxu0 0.0
    %502 = vmatpush1.msra.mxu0 0.0
    %503 = vmatprep.subr.mxu0 0.0
    %504 = vmatpush1.msra.mxu0 0.0
    %505 = vmatprep.subr.mxu0 0.0
    %506 = vmatpush1.msra.mxu0 %v27
    %507 = vmatprep.subr.mxu0 0.0
    %508 = vmatpush1.msra.mxu0 %v26
    %509 = vmatprep.subr.mxu0 0.0
    %510 = vmatpush1.msra.mxu0 %v25
    %511 = vmatprep.subr.mxu0 0.0
    %512 = vmatpush1.msra.mxu0 %v24
    %513 = vmatprep.subr.mxu0 0.0
    %514 = vmatpush2.msra.mxu0 0.0
    %515 = vmatprep.subr.mxu0 0.0
    %516 = vmatpush2.msra.mxu0 0.0
    %517 = vmatprep.subr.mxu0 0.0
    %518 = vmatpush2.msra.mxu0 0.0
    %519 = vmatprep.subr.mxu0 0.0
    %520 = vmatpush2.msra.mxu0 0.0
    %521 = vmatprep.subr.mxu0 0.0
    %522 = vmatpush2.msra.mxu0 0.0
    %523 = vmatprep.subr.mxu0 0.0
    %524 = vmatpush2.msra.mxu0 0.0
    %525 = vmatprep.subr.mxu0 0.0
    %526 = vmatpush2.msra.mxu0 0.0
    %527 = vmatprep.subr.mxu0 0.0
    %528 = vmatpush2.msra.mxu0 0.0
    %529 = vmatprep.subr.mxu0 0.0
    %530 = vmatpush2.msra.mxu0 0.0
    %531 = vmatprep.subr.mxu0 0.0
    %532 = vmatpush2.msra.mxu0 0.0
    %533 = vmatprep.subr.mxu0 0.0
    %534 = vmatpush2.msra.mxu0 0.0
    %535 = vmatprep.subr.mxu0 0.0
    %536 = vmatpush2.msra.mxu0 0.0
    %537 = vmatprep.subr.mxu0 0.0
    %538 = vmatpush2.msra.mxu0 0.0
    %539 = vmatprep.subr.mxu0 0.0
    %540 = vmatpush2.msra.mxu0 0.0
    %541 = vmatprep.subr.mxu0 0.0
    %542 = vmatpush2.msra.mxu0 0.0
    %543 = vmatprep.subr.mxu0 0.0
    %544 = vmatpush2.msra.mxu0 0.0
    %545 = vmatprep.mubr.f32.mxu0 0.0
    %546 = vmatmul.mubr.f32.gmra.mxu0 %v479
    %v547 = vpop.f32.mrf.mxu0
    %v548 = vadd.f32 0.0, %v547
    %v549 = vpop.f32.mrf.mxu0
    %550 = vdwg.mxu0
    %v551 = vld [vmem:[%s3] sm:$0xff]
    %v552 = vld [vmem:[%s3 + $0x8] sm:$0xff]
    %v553 = vlaneseq
    %v554 = vand.u32 %v553, 127
    %555 = vset.pattern.permute.xlu0 0
    %556 = vperm.xlu0 %555, %v551
    %v557 = vpop.permute.xlu0 %556
    %558 = vset.pattern.permute.xlu0 0
    %559 = vperm.xlu0 %558, %v552
    %v560 = vpop.permute.xlu0 %559
    %vm561 = vcmp.eq.s32.totalorder %v557, %v554
    %vm562 = vcmp.eq.s32.totalorder %v560, %v554
    %v563 = vsel %vm561, 1, 0
    %v564 = vsel %vm562, 1, 0
    %v565 = vcvt.s32.f32 %v563
    %v566 = vcvt.s32.f32 %v564
    %v567 = vlaneseq
    %v568 = vshrl.u32 %v567, 7
    %v569 = vld [vmem:[%s4] sm:$0x1]
    %v570 = vlaneseq
    %v571 = vshrl.u32 %v570, 7
    %v572 = vsub.s32 0, %v571
    %v573 = vrot.slane %v569, %v572
    %vm574 = vcmp.eq.s32.totalorder %v568, %v573
    %v575 = vsel %vm574, 1, 0
    %v576 = vcvt.s32.f32 %v575
    %vm577 = vcmask 64512
    %v579 = vsel %vm577, %v565, 0
    %v582 = vsel %vm577, %v566, 0
    %584 = vmatprep.subr.mxu0 0.0
    %585 = vmatpush1.msra.mxu0 0.0
    %586 = vmatprep.subr.mxu0 0.0
    %587 = vmatpush1.msra.mxu0 0.0
    %588 = vmatprep.subr.mxu0 0.0
    %589 = vmatpush1.msra.mxu0 0.0
    %590 = vmatprep.subr.mxu0 0.0
    %591 = vmatpush1.msra.mxu0 0.0
    %592 = vmatprep.subr.mxu0 0.0
    %593 = vmatpush1.msra.mxu0 0.0
    %594 = vmatprep.subr.mxu0 0.0
    %595 = vmatpush1.msra.mxu0 0.0
    %596 = vmatprep.subr.mxu0 0.0
    %597 = vmatpush1.msra.mxu0 0.0
    %598 = vmatprep.subr.mxu0 0.0
    %599 = vmatpush1.msra.mxu0 0.0
    %600 = vmatprep.subr.mxu0 0.0
    %601 = vmatpush1.msra.mxu0 0.0
    %602 = vmatprep.subr.mxu0 0.0
    %603 = vmatpush1.msra.mxu0 0.0
    %604 = vmatprep.subr.mxu0 0.0
    %605 = vmatpush1.msra.mxu0 0.0
    %606 = vmatprep.subr.mxu0 0.0
    %607 = vmatpush1.msra.mxu0 0.0
    %608 = vmatprep.subr.mxu0 0.0
    %609 = vmatpush1.msra.mxu0 0.0
    %610 = vmatprep.subr.mxu0 0.0
    %611 = vmatpush1.msra.mxu0 0.0
    %612 = vmatprep.subr.mxu0 0.0
    %613 = vmatpush1.msra.mxu0 0.0
    %614 = vmatprep.subr.mxu0 0.0
    %615 = vmatpush1.msra.mxu0 %v548
    %616 = vmatprep.subr.mxu0 0.0
    %617 = vmatpush2.msra.mxu0 0.0
    %618 = vmatprep.subr.mxu0 0.0
    %619 = vmatpush2.msra.mxu0 0.0
    %620 = vmatprep.subr.mxu0 0.0
    %621 = vmatpush2.msra.mxu0 0.0
    %622 = vmatprep.subr.mxu0 0.0
    %623 = vmatpush2.msra.mxu0 0.0
    %624 = vmatprep.subr.mxu0 0.0
    %625 = vmatpush2.msra.mxu0 0.0
    %626 = vmatprep.subr.mxu0 0.0
    %627 = vmatpush2.msra.mxu0 0.0
    %628 = vmatprep.subr.mxu0 0.0
    %629 = vmatpush2.msra.mxu0 0.0
    %630 = vmatprep.subr.mxu0 0.0
    %631 = vmatpush2.msra.mxu0 0.0
    %632 = vmatprep.subr.mxu0 0.0
    %633 = vmatpush2.msra.mxu0 0.0
    %634 = vmatprep.subr.mxu0 0.0
    %635 = vmatpush2.msra.mxu0 0.0
    %636 = vmatprep.subr.mxu0 0.0
    %637 = vmatpush2.msra.mxu0 0.0
    %638 = vmatprep.subr.mxu0 0.0
    %639 = vmatpush2.msra.mxu0 0.0
    %640 = vmatprep.subr.mxu0 0.0
    %641 = vmatpush2.msra.mxu0 0.0
    %642 = vmatprep.subr.mxu0 0.0
    %643 = vmatpush2.msra.mxu0 0.0
    %644 = vmatprep.subr.mxu0 0.0
    %645 = vmatpush2.msra.mxu0 0.0
    %646 = vmatprep.subr.mxu0 0.0
    %647 = vmatpush2.msra.mxu0 0.0
    %648 = vmatprep.mubr.f32.mxu0 0.0
    %649 = vmatmul.mubr.f32.gmra.mxu0 %v579
    %v650 = vpop.f32.mrf.mxu0
    %v651 = vadd.f32 0.0, %v650
    %v652 = vpop.f32.mrf.mxu0
    %653 = vmatprep.mubr.f32.mxu0 0.0
    %654 = vmatmul.mubr.f32.gmra.mxu0 %v582
    %v655 = vpop.f32.mrf.mxu0
    %v656 = vadd.f32 0.0, %v655
    %v657 = vpop.f32.mrf.mxu0
    %658 = vdwg.mxu0
    %v659 = vmul.f32 %v651, %v475
    %v660 = vmul.f32 %v656, %v476
    %v662 = vsel %vm45, %v576, 0
    %664 = vmatprep.subr.mxu0 0.0
    %665 = vmatpush1.msra.mxu0 0.0
    %666 = vmatprep.subr.mxu0 0.0
    %667 = vmatpush1.msra.mxu0 0.0
    %668 = vmatprep.subr.mxu0 0.0
    %669 = vmatpush1.msra.mxu0 0.0
    %670 = vmatprep.subr.mxu0 0.0
    %671 = vmatpush1.msra.mxu0 0.0
    %672 = vmatprep.subr.mxu0 0.0
    %673 = vmatpush1.msra.mxu0 0.0
    %674 = vmatprep.subr.mxu0 0.0
    %675 = vmatpush1.msra.mxu0 0.0
    %676 = vmatprep.subr.mxu0 0.0
    %677 = vmatpush1.msra.mxu0 0.0
    %678 = vmatprep.subr.mxu0 0.0
    %679 = vmatpush1.msra.mxu0 0.0
    %680 = vmatprep.subr.mxu0 0.0
    %681 = vmatpush1.msra.mxu0 0.0
    %682 = vmatprep.subr.mxu0 0.0
    %683 = vmatpush1.msra.mxu0 0.0
    %684 = vmatprep.subr.mxu0 0.0
    %685 = vmatpush1.msra.mxu0 0.0
    %686 = vmatprep.subr.mxu0 0.0
    %687 = vmatpush1.msra.mxu0 0.0
    %688 = vmatprep.subr.mxu0 0.0
    %689 = vmatpush1.msra.mxu0 0.0
    %690 = vmatprep.subr.mxu0 0.0
    %691 = vmatpush1.msra.mxu0 0.0
    %692 = vmatprep.subr.mxu0 0.0
    %693 = vmatpush1.msra.mxu0 %v660
    %694 = vmatprep.subr.mxu0 0.0
    %695 = vmatpush1.msra.mxu0 %v659
    %696 = vmatprep.subr.mxu0 0.0
    %697 = vmatpush2.msra.mxu0 0.0
    %698 = vmatprep.subr.mxu0 0.0
    %699 = vmatpush2.msra.mxu0 0.0
    %700 = vmatprep.subr.mxu0 0.0
    %701 = vmatpush2.msra.mxu0 0.0
    %702 = vmatprep.subr.mxu0 0.0
    %703 = vmatpush2.msra.mxu0 0.0
    %704 = vmatprep.subr.mxu0 0.0
    %705 = vmatpush2.msra.mxu0 0.0
    %706 = vmatprep.subr.mxu0 0.0
    %707 = vmatpush2.msra.mxu0 0.0
    %708 = vmatprep.subr.mxu0 0.0
    %709 = vmatpush2.msra.mxu0 0.0
    %710 = vmatprep.subr.mxu0 0.0
    %711 = vmatpush2.msra.mxu0 0.0
    %712 = vmatprep.subr.mxu0 0.0
    %713 = vmatpush2.msra.mxu0 0.0
    %714 = vmatprep.subr.mxu0 0.0
    %715 = vmatpush2.msra.mxu0 0.0
    %716 = vmatprep.subr.mxu0 0.0
    %717 = vmatpush2.msra.mxu0 0.0
    %718 = vmatprep.subr.mxu0 0.0
    %719 = vmatpush2.msra.mxu0 0.0
    %720 = vmatprep.subr.mxu0 0.0
    %721 = vmatpush2.msra.mxu0 0.0
    %722 = vmatprep.subr.mxu0 0.0
    %723 = vmatpush2.msra.mxu0 0.0
    %724 = vmatprep.subr.mxu0 0.0
    %725 = vmatpush2.msra.mxu0 0.0
    %726 = vmatprep.subr.mxu0 0.0
    %727 = vmatpush2.msra.mxu0 0.0
    %728 = vmatprep.mubr.f32.mxu0 0.0
    %729 = vmatmul.mubr.f32.gmra.mxu0 %v662
    %v730 = vpop.f32.mrf.mxu0
    %v731 = vadd.f32 0.0, %v730
    %v732 = vpop.f32.mrf.mxu0
    %733 = vdwg.mxu0
    %v734 = vlaneseq
    %v735 = vshrl.u32 %v734, 7
    %v736 = vsub.s32 2, %v735
    %v737 = vrot.slane %v38, %v736
    %v739 = vsel %vm169, %v731, 0
    %741 = vmatprep.subr.mxu0 0.0
    %742 = vmatpush1.msra.mxu0 0.0
    %743 = vmatprep.subr.mxu0 0.0
    %744 = vmatpush1.msra.mxu0 0.0
    %745 = vmatprep.subr.mxu0 0.0
    %746 = vmatpush1.msra.mxu0 0.0
    %747 = vmatprep.subr.mxu0 0.0
    %748 = vmatpush1.msra.mxu0 0.0
    %749 = vmatprep.subr.mxu0 0.0
    %750 = vmatpush1.msra.mxu0 0.0
    %751 = vmatprep.subr.mxu0 0.0
    %752 = vmatpush1.msra.mxu0 0.0
    %753 = vmatprep.subr.mxu0 0.0
    %754 = vmatpush1.msra.mxu0 0.0
    %755 = vmatprep.subr.mxu0 0.0
    %756 = vmatpush1.msra.mxu0 0.0
    %757 = vmatprep.subr.mxu0 0.0
    %758 = vmatpush1.msra.mxu0 0.0
    %759 = vmatprep.subr.mxu0 0.0
    %760 = vmatpush1.msra.mxu0 0.0
    %761 = vmatprep.subr.mxu0 0.0
    %762 = vmatpush1.msra.mxu0 0.0
    %763 = vmatprep.subr.mxu0 0.0
    %764 = vmatpush1.msra.mxu0 0.0
    %765 = vmatprep.subr.mxu0 0.0
    %766 = vmatpush1.msra.mxu0 %v37
    %767 = vmatprep.subr.mxu0 0.0
    %768 = vmatpush1.msra.mxu0 %v36
    %769 = vmatprep.subr.mxu0 0.0
    %770 = vmatpush1.msra.mxu0 %v35
    %771 = vmatprep.subr.mxu0 0.0
    %772 = vmatpush1.msra.mxu0 %v34
    %773 = vmatprep.subr.mxu0 0.0
    %774 = vmatpush2.msra.mxu0 0.0
    %775 = vmatprep.subr.mxu0 0.0
    %776 = vmatpush2.msra.mxu0 0.0
    %777 = vmatprep.subr.mxu0 0.0
    %778 = vmatpush2.msra.mxu0 0.0
    %779 = vmatprep.subr.mxu0 0.0
    %780 = vmatpush2.msra.mxu0 0.0
    %781 = vmatprep.subr.mxu0 0.0
    %782 = vmatpush2.msra.mxu0 0.0
    %783 = vmatprep.subr.mxu0 0.0
    %784 = vmatpush2.msra.mxu0 0.0
    %785 = vmatprep.subr.mxu0 0.0
    %786 = vmatpush2.msra.mxu0 0.0
    %787 = vmatprep.subr.mxu0 0.0
    %788 = vmatpush2.msra.mxu0 0.0
    %789 = vmatprep.subr.mxu0 0.0
    %790 = vmatpush2.msra.mxu0 0.0
    %791 = vmatprep.subr.mxu0 0.0
    %792 = vmatpush2.msra.mxu0 0.0
    %793 = vmatprep.subr.mxu0 0.0
    %794 = vmatpush2.msra.mxu0 0.0
    %795 = vmatprep.subr.mxu0 0.0
    %796 = vmatpush2.msra.mxu0 0.0
    %797 = vmatprep.subr.mxu0 0.0
    %798 = vmatpush2.msra.mxu0 0.0
    %799 = vmatprep.subr.mxu0 0.0
    %800 = vmatpush2.msra.mxu0 0.0
    %801 = vmatprep.subr.mxu0 0.0
    %802 = vmatpush2.msra.mxu0 0.0
    %803 = vmatprep.subr.mxu0 0.0
    %804 = vmatpush2.msra.mxu0 0.0
    %805 = vmatprep.mubr.f32.mxu0 0.0
    %806 = vmatmul.mubr.f32.gmra.mxu0 %v739
    %v807 = vpop.f32.mrf.mxu0
    %v808 = vadd.f32 %v737, %v807
    %v809 = vpop.f32.mrf.mxu0
    %810 = vdwg.mxu0
    %811 = vst.msk [vmem:[#allocation2] sm:$0xff] %vm169, %v808
    // Predicated region
    $region26: #{tpu_custom_call.1} parent=1 // pred_check
      _
    $region27: #{tpu_custom_call.1} parent=1 // pred_check_branch
      %813 = sbr.rel (0) target = $region29
    $region28: #{tpu_custom_call.1} parent=1 // pred_region
      %s815 = ssub.s32 128, 128
      %816 = vsyncadd [#allocation3], %s815
      %s818 = sshll.u32 [#allocation2], 4
      %s819 = int_to_ptr.vmem [resolvable:$true] %s818
      %821 = dma.vmem_to_hbm [thread:$0]  %s819, 128, %s6, [#allocation3]
    $region29: #{tpu_custom_call.1} parent=1 // pred_fallthru
      _
    // Predicated region
    $region30: #{tpu_custom_call.1} parent=1 // pred_check
      _
    $region31: #{tpu_custom_call.1} parent=1 // pred_check_branch
      %823 = sbr.rel (0) target = $region33
    $region32: #{tpu_custom_call.1} parent=1 // pred_region
      %824 = dma.done [#allocation3], 128
    $region33: #{tpu_custom_call.1} parent=1 // pred_fallthru
      _
    %825 = vsyncpa [#allocation3], 1

</llo_original>
